<compile_context>
chip_gen: v7x
topology: tpu7x:2x2x1
jax: 0.10.0
libtpu: 0.0.40
codegen_flags: <defaults>
</compile_context>

<pallas_src>
import jax
import jax.numpy as jnp
from jax.experimental import pallas as pl
from jax.experimental.pallas import tpu as pltpu


def _encoder_kernel(x_ref, w1_ref, b1_ref, w2_ref, b2_ref, o_ref, acc_ref):
    # x_ref:  (TM, TK)  bf16   current row/K tile of the flattened views
    # w1_ref: (TK, Hd)  bf16   current K tile of W1
    # b1_ref: (1, Hd)   f32    resident (constant index_map)
    # w2_ref: (Hd, F)   bf16   resident (constant index_map)
    # b2_ref: (1, F)    f32    resident (constant index_map)
    # o_ref:  (TM, F)   f32    lane-dense output tile (F = 128)
    # acc_ref:(TM, Hd)  f32    VMEM scratch accumulator for x @ W1
    k = pl.program_id(1)

    @pl.when(k == 0)
    def _():
        acc_ref[...] = jnp.zeros_like(acc_ref)

    # bf16 x bf16 -> f32 accumulate on the MXU.
    acc_ref[...] += jnp.dot(
        x_ref[...], w1_ref[...], preferred_element_type=jnp.float32
    )

    @pl.when(k == pl.num_programs(1) - 1)
    def _():
        # Bias add + ReLU in f32, then bf16 for the second MXU pass.
        h = jnp.maximum(acc_ref[...] + b1_ref[...], 0.0)
        y = jnp.dot(
            h.astype(w2_ref.dtype), w2_ref[...],
            preferred_element_type=jnp.float32,
        ) + b2_ref[...]
        o_ref[...] = y.astype(o_ref.dtype)


def _pick_row_tile(n):
    # Full rows if small (block_shape == full dim satisfies the (8,128) rule);
    # otherwise the largest sublane-aligned tile that divides N.
    if n <= 256:
        return n
    for tm in (256, 128, 64, 32, 16, 8):
        if n % tm == 0:
            return tm
    return n


def _pick_k_tile(d):
    if d <= 512:
        return d
    for tk in (512, 256, 128):
        if d % tk == 0:
            return tk
    return d


def asym_view_pair_encoder(x, w1, b1, w2, b2):
    """x: (B, 2, C, H, W) float32.  Returns (B, 2*F) matching torch.cat(dim=1)."""
    B, V, C, H, W = x.shape
    assert V == 2, "AsymViewPairEncoder expects exactly two views"
    D = C * H * W
    Hd = w1.shape[1]
    F = w2.shape[1]
    N = B * V

    # Fold views into the batch: rows are contiguous in row-major
    # (B, V, C, H, W) order, so this reshape is free (no transpose, no copy).
    # Cast the MXU operands to bf16; biases and accumulation stay f32.
    x_flat = x.reshape(N, D).astype(jnp.bfloat16)
    w1_c = w1.astype(jnp.bfloat16)
    w2_c = w2.astype(jnp.bfloat16)
    b1_2d = b1.reshape(1, Hd).astype(jnp.float32)
    b2_2d = b2.reshape(1, F).astype(jnp.float32)

    TM = _pick_row_tile(N)
    TK = _pick_k_tile(D)
    grid = (N // TM, D // TK)

    flops = 2 * N * D * Hd + 2 * N * Hd * F
    bytes_accessed = (
        x_flat.size * 2          # bf16 activations
        + w1_c.size * 2          # bf16 W1
        + w2_c.size * 2          # bf16 W2
        + b1_2d.size * 4 + b2_2d.size * 4
        + N * F * 4              # f32 output
    )

    out = pl.pallas_call(
        _encoder_kernel,
        out_shape=jax.ShapeDtypeStruct((N, F), jnp.float32),
        grid_spec=pltpu.PrefetchScalarGridSpec(
            num_scalar_prefetch=0,
            grid=grid,
            in_specs=[
                pl.BlockSpec((TM, TK), lambda i, k: (i, k)),   # x tile
                pl.BlockSpec((TK, Hd), lambda i, k: (k, 0)),   # W1 K-tile
                pl.BlockSpec((1, Hd), lambda i, k: (0, 0)),    # b1 (resident)
                pl.BlockSpec((Hd, F), lambda i, k: (0, 0)),    # W2 (resident)
                pl.BlockSpec((1, F), lambda i, k: (0, 0)),     # b2 (resident)
            ],
            out_specs=pl.BlockSpec((TM, F), lambda i, k: (i, 0)),
            scratch_shapes=[pltpu.VMEM((TM, Hd), jnp.float32)],
        ),
        compiler_params=pltpu.CompilerParams(
            dimension_semantics=("parallel", "arbitrary"),
        ),
        cost_estimate=pl.CostEstimate(
            flops=flops, transcendentals=0, bytes_accessed=bytes_accessed
        ),
    )(x_flat, w1_c, b1_2d, w2_c, b2_2d)

    # (N, F) row order is (b=0,v=0),(b=0,v=1),(b=1,v=0),... so a row-major
    # reshape to (B, V*F) is exactly the dim=1 concatenation of the two views.
    return out.reshape(B, V * F)


def _reference_f32(x, w1, b1, w2, b2):
    B, V, C, H, W = x.shape
    D = C * H * W

    def enc(v):  # v: (B, C, H, W)
        h = jnp.maximum(v.reshape(B, D) @ w1 + b1, 0.0)
        return h @ w2 + b2

    return jnp.concatenate([enc(x[:, 0]), enc(x[:, 1])], axis=1)


def _reference_bf16(x, w1, b1, w2, b2):
    # Mirrors the kernel's precision: bf16 operands, f32 accumulate.
    B, V, C, H, W = x.shape
    D = C * H * W
    bf = jnp.bfloat16

    def enc(v):
        h = jnp.dot(v.reshape(B, D).astype(bf), w1.astype(bf),
                    preferred_element_type=jnp.float32)
        h = jnp.maximum(h + b1, 0.0)
        y = jnp.dot(h.astype(bf), w2.astype(bf),
                    preferred_element_type=jnp.float32)
        return y + b2

    return jnp.concatenate([enc(x[:, 0]), enc(x[:, 1])], axis=1)


if __name__ == "__main__":
    # Small shapes consistent with the module: batch=2, two views, C=4, 16x16.
    B, C, H, W = 2, 4, 16, 16
    D = C * H * W          # 1024
    HID = 128              # hidden width of the synthetic encoder
    F = 128                # per-view feature dim (lane-aligned)

    key = jax.random.PRNGKey(0)
    kx, k1, k2, k3, k4 = jax.random.split(key, 5)

    x = jax.random.normal(kx, (B, 2, C, H, W), dtype=jnp.float32)
    w1 = jax.random.normal(k1, (D, HID), dtype=jnp.float32) * 0.02
    b1 = jax.random.normal(k2, (HID,), dtype=jnp.float32) * 0.01
    w2 = jax.random.normal(k3, (HID, F), dtype=jnp.float32) * 0.02
    b2 = jax.random.normal(k4, (F,), dtype=jnp.float32) * 0.01

    out = asym_view_pair_encoder(x, w1, b1, w2, b2)
    out = jax.block_until_ready(out)
    assert out.shape == (B, 2 * F), out.shape

    # Semantic check vs the f32 reference (loose: kernel uses bf16 operands).
    ref32 = _reference_f32(x, w1, b1, w2, b2)
    assert jnp.allclose(out, ref32, atol=2e-2, rtol=2e-2), "mismatch vs f32 ref"

    # Precision-matched check (tight: same bf16/f32 mixed precision).
    ref16 = _reference_bf16(x, w1, b1, w2, b2)
    assert jnp.allclose(out, ref16, atol=1e-3, rtol=1e-3), "mismatch vs bf16 ref"

    print("KERNEL_OK")
</pallas_src>

<mosaic_0001>
module attributes {stable_mosaic.version = 11 : i64} {
  func.func @_encoder_kernel(%arg0: i32, %arg1: i32, %arg2: memref<4x512xbf16, #tpu.memory_space<vmem>>, %arg3: memref<512x128xbf16, #tpu.memory_space<vmem>>, %arg4: memref<1x128xf32, #tpu.memory_space<vmem>>, %arg5: memref<128x128xbf16, #tpu.memory_space<vmem>>, %arg6: memref<1x128xf32, #tpu.memory_space<vmem>>, %arg7: memref<4x128xf32, #tpu.memory_space<vmem>>, %arg8: memref<4x128xf32, #tpu.memory_space<vmem>>) attributes {dimension_semantics = [#tpu.dimension_semantics<parallel>, #tpu.dimension_semantics<arbitrary>], iteration_bounds = array<i64: 1, 2>, scalar_prefetch = 0 : i64, scratch_operands = 1 : i64, tpu.core_type = #tpu.core_type<tc>, window_params = [{transform_indices = @transform_0, window_bounds = array<i64: 4, 512>}, {transform_indices = @transform_1, window_bounds = array<i64: 512, 128>}, {pipeline_mode = #tpu.pipeline_mode<synchronous>, transform_indices = @transform_2, window_bounds = array<i64: 1, 128>}, {pipeline_mode = #tpu.pipeline_mode<synchronous>, transform_indices = @transform_3, window_bounds = array<i64: 128, 128>}, {pipeline_mode = #tpu.pipeline_mode<synchronous>, transform_indices = @transform_4, window_bounds = array<i64: 1, 128>}, {transform_indices = @transform_5, window_bounds = array<i64: 4, 128>}]} {
    %c0_i32 = arith.constant 0 : i32
    %0 = arith.cmpi eq, %arg1, %c0_i32 : i32
    %1 = arith.extui %0 : i1 to i32
    %c0_i32_0 = arith.constant 0 : i32
    %2 = arith.cmpi ne, %1, %c0_i32_0 : i32
    scf.if %2 {
      %cst_9 = arith.constant 0.000000e+00 : f32
      %12 = vector.broadcast %cst_9 : f32 to vector<4x128xf32>
      %c0_10 = arith.constant 0 : index
      %c0_11 = arith.constant 0 : index
      %13 = vector.load %arg8[%c0_10, %c0_11] : memref<4x128xf32, #tpu.memory_space<vmem>>, vector<4x128xf32>
      tpu.vector_store %arg8[%c0_10, %c0_11], %12 {strides = array<i32>} : memref<4x128xf32, #tpu.memory_space<vmem>>, vector<4x128xf32>,
    } else {
    }
    %c0 = arith.constant 0 : index
    %c0_1 = arith.constant 0 : index
    %3 = vector.load %arg8[%c0, %c0_1] : memref<4x128xf32, #tpu.memory_space<vmem>>, vector<4x128xf32>
    %c0_2 = arith.constant 0 : index
    %c0_3 = arith.constant 0 : index
    %4 = vector.load %arg2[%c0_2, %c0_3] : memref<4x512xbf16, #tpu.memory_space<vmem>>, vector<4x512xbf16>
    %c0_4 = arith.constant 0 : index
    %c0_5 = arith.constant 0 : index
    %5 = vector.load %arg3[%c0_4, %c0_5] : memref<512x128xbf16, #tpu.memory_space<vmem>>, vector<512x128xbf16>
    %cst = arith.constant dense<0.000000e+00> : vector<4x128xf32>
    %6 = tpu.matmul %4, %5, %cst {dimension_numbers = #tpu.dot_dimension_numbers<[1], [0], [0], [1], [0, 0, 1, 1], [], []>} : vector<4x512xbf16>, vector<512x128xbf16>, vector<4x128xf32> -> vector<4x128xf32>
    %7 = arith.addf %3, %6 : vector<4x128xf32>
    %c0_6 = arith.constant 0 : index
    %c0_7 = arith.constant 0 : index
    %8 = vector.load %arg8[%c0_6, %c0_7] : memref<4x128xf32, #tpu.memory_space<vmem>>, vector<4x128xf32>
    tpu.vector_store %arg8[%c0_6, %c0_7], %7 {strides = array<i32>} : memref<4x128xf32, #tpu.memory_space<vmem>>, vector<4x128xf32>,
    %c1_i32 = arith.constant 1 : i32
    %9 = arith.cmpi eq, %arg1, %c1_i32 : i32
    %10 = arith.extui %9 : i1 to i32
    %c0_i32_8 = arith.constant 0 : i32
    %11 = arith.cmpi ne, %10, %c0_i32_8 : i32
    scf.if %11 {
      %c0_9 = arith.constant 0 : index
      %c0_10 = arith.constant 0 : index
      %12 = vector.load %arg8[%c0_9, %c0_10] : memref<4x128xf32, #tpu.memory_space<vmem>>, vector<4x128xf32>
      %c0_11 = arith.constant 0 : index
      %c0_12 = arith.constant 0 : index
      %13 = vector.load %arg4[%c0_11, %c0_12] : memref<1x128xf32, #tpu.memory_space<vmem>>, vector<1x128xf32>
      %14 = vector.broadcast %13 : vector<1x128xf32> to vector<4x128xf32>
      %15 = arith.addf %12, %14 : vector<4x128xf32>
      %cst_13 = arith.constant 0.000000e+00 : f32
      %16 = vector.broadcast %cst_13 : f32 to vector<4x128xf32>
      %17 = arith.maximumf %15, %16 : vector<4x128xf32>
      %18 = arith.truncf %17 : vector<4x128xf32> to vector<4x128xbf16>
      %c0_14 = arith.constant 0 : index
      %c0_15 = arith.constant 0 : index
      %19 = vector.load %arg5[%c0_14, %c0_15] : memref<128x128xbf16, #tpu.memory_space<vmem>>, vector<128x128xbf16>
      %cst_16 = arith.constant dense<0.000000e+00> : vector<4x128xf32>
      %20 = tpu.matmul %18, %19, %cst_16 {dimension_numbers = #tpu.dot_dimension_numbers<[1], [0], [0], [1], [0, 0, 1, 1], [], []>} : vector<4x128xbf16>, vector<128x128xbf16>, vector<4x128xf32> -> vector<4x128xf32>
      %c0_17 = arith.constant 0 : index
      %c0_18 = arith.constant 0 : index
      %21 = vector.load %arg6[%c0_17, %c0_18] : memref<1x128xf32, #tpu.memory_space<vmem>>, vector<1x128xf32>
      %22 = vector.broadcast %21 : vector<1x128xf32> to vector<4x128xf32>
      %23 = arith.addf %20, %22 : vector<4x128xf32>
      %c0_19 = arith.constant 0 : index
      %c0_20 = arith.constant 0 : index
      %24 = vector.load %arg7[%c0_19, %c0_20] : memref<4x128xf32, #tpu.memory_space<vmem>>, vector<4x128xf32>
      tpu.vector_store %arg7[%c0_19, %c0_20], %23 {strides = array<i32>} : memref<4x128xf32, #tpu.memory_space<vmem>>, vector<4x128xf32>,
    } else {
    }
    return
  }
  func.func @transform_0(%arg0: i32, %arg1: i32) -> (i32, i32) {
    %c0_i32 = arith.constant 0 : i32
    return %arg0, %arg1 : i32, i32
  }
  func.func @transform_1(%arg0: i32, %arg1: i32) -> (i32, i32) {
    %c0_i32 = arith.constant 0 : i32
    %c0_i32_0 = arith.constant 0 : i32
    return %arg1, %c0_i32 : i32, i32
  }
  func.func @transform_2(%arg0: i32, %arg1: i32) -> (i32, i32) {
    %c0_i32 = arith.constant 0 : i32
    %c0_i32_0 = arith.constant 0 : i32
    %c0_i32_1 = arith.constant 0 : i32
    return %c0_i32, %c0_i32_0 : i32, i32
  }
  func.func @transform_3(%arg0: i32, %arg1: i32) -> (i32, i32) {
    %c0_i32 = arith.constant 0 : i32
    %c0_i32_0 = arith.constant 0 : i32
    %c0_i32_1 = arith.constant 0 : i32
    return %c0_i32, %c0_i32_0 : i32, i32
  }
  func.func @transform_4(%arg0: i32, %arg1: i32) -> (i32, i32) {
    %c0_i32 = arith.constant 0 : i32
    %c0_i32_0 = arith.constant 0 : i32
    %c0_i32_1 = arith.constant 0 : i32
    return %c0_i32, %c0_i32_0 : i32, i32
  }
  func.func @transform_5(%arg0: i32, %arg1: i32) -> (i32, i32) {
    %c0_i32 = arith.constant 0 : i32
    %c0_i32_0 = arith.constant 0 : i32
    return %arg0, %c0_i32 : i32, i32
  }
}

</mosaic_0001>

<llo_original>
// kernel: tpu_custom_call.1
$region0: #{tpu_custom_call.1}
  #allocation0 [shape = 'u32[]', space=smem, size = 0x4, offset = 0x4, fixed_abs, tag = 'smem constant byte address 0x4 - core index']
  #allocation1 [shape = 'u32[144,128]{1,0:T(1,128)}', space=vmem, size = 0x12000, scoped, tag = 'internal scratch']
  #allocation2 [shape = 'f32[4,128]{1,0:T(4,128)}', space=vmem, size = 0x800, scoped, tag = 'scratch operand']
  %s0 = inlined_call_operand.hbm [shape: bf16[4,1024], index: 0, kind: input, shape index: {}]
  %s1 = inlined_call_operand.hbm [shape: bf16[1024,128], index: 1, kind: input, shape index: {}]
  %s2 = inlined_call_operand.vmem [shape: f32[1,128], index: 2, kind: input, shape index: {}]
  %s3 = inlined_call_operand.hbm [shape: bf16[128,128], index: 3, kind: input, shape index: {}]
  %s4 = inlined_call_operand.vmem [shape: f32[1,128], index: 4, kind: input, shape index: {}]
  %s5 = inlined_call_operand.hbm [shape: f32[4,128], index: 5, kind: output, shape index: {}]
  %s6 = sld [smem:[#allocation0]]
  $region73: #{tpu_custom_call.1} parent=0
    _
  %s8 = ssub.s32 1, %s6
  %s9 = scalar_select 0, %s8, %s6
  $region1: #{tpu_custom_call.1} parent=0
    #allocation3 [shape = 'u8[8192]{0}', space=vmem, size = 0x2000, scoped, tag = 'input window, operand 0']
    #allocation4 [shape = 's32[2]{0}', space=sflag, size = 0x8, scoped, tag = 'scoped memory for tpu_custom_call.1']
    #allocation5 [shape = 's32[2]{0}', space=sflag, size = 0x8, scoped, tag = 'scoped memory for tpu_custom_call.1']
    #allocation6 [shape = 'u8[262144]{0}', space=vmem, size = 0x40000, scoped, tag = 'input window, operand 1']
    #allocation7 [shape = 's32[2]{0}', space=sflag, size = 0x8, scoped, tag = 'scoped memory for tpu_custom_call.1']
    #allocation8 [shape = 'u8[32768]{0}', space=vmem, size = 0x8000, scoped, tag = 'input window, operand 3, single buffered']
    #allocation9 [shape = 'u8[2048]{0}', space=vmem, size = 0x800, scoped, tag = 'output window, operand 0, single buffered']
    %10 = vsyncpa [#allocation4], 0
    %s11 = scalar_lea.sflag [#allocation4], 1
    %12 = vsyncpa %s11, 0
    %13 = vsyncpa [#allocation7], 0
    %s14 = scalar_lea.sflag [#allocation7], 1
    %15 = vsyncpa %s14, 0
    %16 = vsyncpa [#allocation5], 0
    loop: start=0, step=1, limit=4
    $region2: #{tpu_custom_call.1} parent=1 // loop_pre_header
      _
    $region3: #{tpu_custom_call.1} parent=1 // loop_header
      %s18 = sphi 0, %s22
      %p19 = scmp.ge.s32.totalorder %s18, 4
      %s25 = sphi 0, %s37
      %s26 = sphi 0, %s33
      %s27 = sphi 0, %s25
      %s28 = sphi 0, %s26
      %s29 = sphi 0, %s27
      %s30 = sphi 0, %s28
      %s42 = sphi 0, %s44
      %s45 = sphi 0, %s42
      %s46 = sphi 0, %s45
      %s62 = sphi 0, %s46
      %s68 = sphi 0, %s70
      %s71 = sphi 0, %s68
      %s72 = sphi 0, %s71
      %s88 = sphi 0, %s72
      %s92 = sphi 0, %s92
      %s94 = sphi 0, %s92
      %s95 = sphi 0, %s94
      %s109 = sphi 0, %s95
      %s113 = sphi 0, %s113
      %s115 = sphi 0, %s113
      %s116 = sphi 0, %s115
      %s130 = sphi 0, %s116
      %s134 = sphi 0, %s134
      %s136 = sphi 0, %s134
      %s137 = sphi 0, %s136
      %s151 = sphi 0, %s137
      %s157 = sphi 0, %s159
      %s160 = sphi 0, %s157
      %s161 = sphi 0, %s160
      %s177 = sphi 0, %s161
    $region4: #{tpu_custom_call.1} parent=1 // loop_header_branch
      %21 = sbr.rel (%p19) target = $region8
    $region5: #{tpu_custom_call.1} parent=1 // loop_body
      %s23 = ssub.s32 %s18, 1
      %s24 = ssub.s32 %s18, 2
      %s31 = sadd.s32 1, %s26
      %p32 = scmp.ge.s32.totalorder %s31, 2
      %s33 = scalar_select %p32, 0, %s31
      %s34 = sadd.s32 1, %s25
      %s35 = scalar_select %p32, %s34, %s25
      %p36 = scmp.ge.s32.totalorder %s35, 1
      %s37 = scalar_select %p36, 0, %s35
      %s38 = ssub.s32 %s25, %s37
      %s39 = ssub.s32 %s26, %s33
      %s40 = sor.u32 %s38, %s39
      %p41 = scmp.eq.s32.totalorder %s40, 0
      %s43 = sadd.s32 %s42, 1
      %s44 = scalar_select %p41, %s42, %s43
      %p47 = pneg %p41
      %p48 = scmp.eq.s32.totalorder %s18, 1
      %p49 = por %p47, %p48
      %p50 = scmp.ne.s32.totalorder %s42, %s45
      %p51 = scmp.eq.s32.totalorder %s18, 0
      %p52 = por %p50, %p51
      %p53 = scmp.ne.s32.totalorder %s42, %s45
      %p54 = scmp.eq.s32.totalorder %s23, 1
      %p55 = por %p53, %p54
      %p56 = scmp.ne.s32.totalorder %s45, %s46
      %p57 = scmp.eq.s32.totalorder %s23, 0
      %p58 = por %p56, %p57
      %p59 = scmp.ne.s32.totalorder %s45, %s46
      %p60 = scmp.eq.s32.totalorder %s24, 1
      %p61 = por %p59, %p60
      %p63 = scmp.ne.s32.totalorder %s46, %s62
      %p64 = scmp.eq.s32.totalorder %s24, 0
      %p65 = por %p63, %p64
      %s66 = ssub.s32 %s26, %s33
      %p67 = scmp.eq.s32.totalorder %s66, 0
      %s69 = sadd.s32 %s68, 1
      %s70 = scalar_select %p67, %s68, %s69
      %p73 = pneg %p67
      %p74 = scmp.eq.s32.totalorder %s18, 1
      %p75 = por %p73, %p74
      %p76 = scmp.ne.s32.totalorder %s68, %s71
      %p77 = scmp.eq.s32.totalorder %s18, 0
      %p78 = por %p76, %p77
      %p79 = scmp.ne.s32.totalorder %s68, %s71
      %p80 = scmp.eq.s32.totalorder %s23, 1
      %p81 = por %p79, %p80
      %p82 = scmp.ne.s32.totalorder %s71, %s72
      %p83 = scmp.eq.s32.totalorder %s23, 0
      %p84 = por %p82, %p83
      %p85 = scmp.ne.s32.totalorder %s71, %s72
      %p86 = scmp.eq.s32.totalorder %s24, 1
      %p87 = por %p85, %p86
      %p89 = scmp.ne.s32.totalorder %s72, %s88
      %p90 = scmp.eq.s32.totalorder %s24, 0
      %p91 = por %p89, %p90
      %s93 = sadd.s32 %s92, 1
      %p96 = scmp.eq.s32.totalorder %s18, 1
      %p97 = scmp.ne.s32.totalorder %s92, %s94
      %p98 = scmp.eq.s32.totalorder %s18, 0
      %p99 = por %p97, %p98
      %p100 = scmp.ne.s32.totalorder %s92, %s94
      %p101 = scmp.eq.s32.totalorder %s23, 1
      %p102 = por %p100, %p101
      %p103 = scmp.ne.s32.totalorder %s94, %s95
      %p104 = scmp.eq.s32.totalorder %s23, 0
      %p105 = por %p103, %p104
      %p106 = scmp.ne.s32.totalorder %s94, %s95
      %p107 = scmp.eq.s32.totalorder %s24, 1
      %p108 = por %p106, %p107
      %p110 = scmp.ne.s32.totalorder %s95, %s109
      %p111 = scmp.eq.s32.totalorder %s24, 0
      %p112 = por %p110, %p111
      %s114 = sadd.s32 %s113, 1
      %p117 = scmp.eq.s32.totalorder %s18, 1
      %p118 = scmp.ne.s32.totalorder %s113, %s115
      %p119 = scmp.eq.s32.totalorder %s18, 0
      %p120 = por %p118, %p119
      %p121 = scmp.ne.s32.totalorder %s113, %s115
      %p122 = scmp.eq.s32.totalorder %s23, 1
      %p123 = por %p121, %p122
      %p124 = scmp.ne.s32.totalorder %s115, %s116
      %p125 = scmp.eq.s32.totalorder %s23, 0
      %p126 = por %p124, %p125
      %p127 = scmp.ne.s32.totalorder %s115, %s116
      %p128 = scmp.eq.s32.totalorder %s24, 1
      %p129 = por %p127, %p128
      %p131 = scmp.ne.s32.totalorder %s116, %s130
      %p132 = scmp.eq.s32.totalorder %s24, 0
      %p133 = por %p131, %p132
      %s135 = sadd.s32 %s134, 1
      %p138 = scmp.eq.s32.totalorder %s18, 1
      %p139 = scmp.ne.s32.totalorder %s134, %s136
      %p140 = scmp.eq.s32.totalorder %s18, 0
      %p141 = por %p139, %p140
      %p142 = scmp.ne.s32.totalorder %s134, %s136
      %p143 = scmp.eq.s32.totalorder %s23, 1
      %p144 = por %p142, %p143
      %p145 = scmp.ne.s32.totalorder %s136, %s137
      %p146 = scmp.eq.s32.totalorder %s23, 0
      %p147 = por %p145, %p146
      %p148 = scmp.ne.s32.totalorder %s136, %s137
      %p149 = scmp.eq.s32.totalorder %s24, 1
      %p150 = por %p148, %p149
      %p152 = scmp.ne.s32.totalorder %s137, %s151
      %p153 = scmp.eq.s32.totalorder %s24, 0
      %p154 = por %p152, %p153
      %s155 = ssub.s32 %s25, %s37
      %p156 = scmp.eq.s32.totalorder %s155, 0
      %s158 = sadd.s32 %s157, 1
      %s159 = scalar_select %p156, %s157, %s158
      %p162 = pneg %p156
      %p163 = scmp.eq.s32.totalorder %s18, 1
      %p164 = por %p162, %p163
      %p165 = scmp.ne.s32.totalorder %s157, %s160
      %p166 = scmp.eq.s32.totalorder %s18, 0
      %p167 = por %p165, %p166
      %p168 = scmp.ne.s32.totalorder %s157, %s160
      %p169 = scmp.eq.s32.totalorder %s23, 1
      %p170 = por %p168, %p169
      %p171 = scmp.ne.s32.totalorder %s160, %s161
      %p172 = scmp.eq.s32.totalorder %s23, 0
      %p173 = por %p171, %p172
      %p174 = scmp.ne.s32.totalorder %s160, %s161
      %p175 = scmp.eq.s32.totalorder %s24, 1
      %p176 = por %p174, %p175
      %p178 = scmp.ne.s32.totalorder %s161, %s177
      %p179 = scmp.eq.s32.totalorder %s24, 0
      %p180 = por %p178, %p179
      %p181 = scmp.le.s32.totalorder 1, %s18
      %p182 = scmp.lt.s32.totalorder %s18, 3
      %p183 = pnand %p181, %p182
      %p184 = pneg %p183
      // Predicated region
      $region9: #{tpu_custom_call.1} parent=5 // pred_check
        _
      $region10: #{tpu_custom_call.1} parent=5 // pred_check_branch
        %186 = sbr.rel (%p183) target = $region12
      $region11: #{tpu_custom_call.1} parent=5 // pred_region
        %s187 = ssub.s32 %s18, 1
        // Predicated region
        $region13: #{tpu_custom_call.1} parent=11 // pred_check
          %p188 = pneg %p105
        $region14: #{tpu_custom_call.1} parent=11 // pred_check_branch
          %190 = sbr.rel (%p188) target = $region16
        $region15: #{tpu_custom_call.1} parent=11 // pred_region
          _
        $region16: #{tpu_custom_call.1} parent=11 // pred_fallthru
          _
        // Predicated region
        $region17: #{tpu_custom_call.1} parent=11 // pred_check
          %p191 = pneg %p126
        $region18: #{tpu_custom_call.1} parent=11 // pred_check_branch
          %193 = sbr.rel (%p191) target = $region20
        $region19: #{tpu_custom_call.1} parent=11 // pred_region
          %s195 = ssub.s32 1024, 1024
          %196 = vsyncadd [#allocation7], %s195
          %s197 = sshll.u32 [#allocation8], 4
          %s198 = int_to_ptr.vmem [resolvable:$true] %s197
          %203 = dma.hbm_to_vmem [thread:$0]  %s3, 1024, %s198, [#allocation7], 64, 64, 4
        $region20: #{tpu_custom_call.1} parent=11 // pred_fallthru
          _
        // Predicated region
        $region21: #{tpu_custom_call.1} parent=11 // pred_check
          %p204 = pneg %p147
        $region22: #{tpu_custom_call.1} parent=11 // pred_check_branch
          %206 = sbr.rel (%p204) target = $region24
        $region23: #{tpu_custom_call.1} parent=11 // pred_region
          _
        $region24: #{tpu_custom_call.1} parent=11 // pred_fallthru
          _
      $region12: #{tpu_custom_call.1} parent=5 // pred_fallthru
        _
      %p207 = scmp.lt.s32.totalorder %s18, 2
      // Predicated region
      $region25: #{tpu_custom_call.1} parent=5 // pred_check
        %p208 = pneg %p207
      $region26: #{tpu_custom_call.1} parent=5 // pred_check_branch
        %210 = sbr.rel (%p208) target = $region28
      $region27: #{tpu_custom_call.1} parent=5 // pred_region
        // Predicated region
        $region29: #{tpu_custom_call.1} parent=27 // pred_check
          %p211 = pneg %p52
        $region30: #{tpu_custom_call.1} parent=27 // pred_check_branch
          %213 = sbr.rel (%p211) target = $region32
        $region31: #{tpu_custom_call.1} parent=27 // pred_region
          %s214 = sand.u32 %s42, 1
          %s215 = scalar_lea.sflag [#allocation4], %s214
          %s216 = sand.u32 %s42, 1
          %s217 = smul.addr %s216, 8
          %s218 = scalar_lea.vmem [#allocation3], %s217
          %s219 = smul.u32 4, %s26
          %s221 = ssub.s32 128, 128
          %222 = vsyncadd %s215, %s221
          %s223 = smul.addr %s25, 8
          %s224 = sadd.s32 %s219, %s223
          %s225 = smul.addr %s224, 32
          %s226 = scalar_lea.hbm %s0, %s225
          %s228 = sshll.u32 %s218, 4
          %s229 = int_to_ptr.vmem [resolvable:$true] %s228
          %231 = dma.hbm_to_vmem [thread:$0]  %s226, 128, %s229, %s215
        $region32: #{tpu_custom_call.1} parent=27 // pred_fallthru
          _
        // Predicated region
        $region33: #{tpu_custom_call.1} parent=27 // pred_check
          %p232 = pneg %p78
        $region34: #{tpu_custom_call.1} parent=27 // pred_check_branch
          %234 = sbr.rel (%p232) target = $region36
        $region35: #{tpu_custom_call.1} parent=27 // pred_region
          %s235 = sand.u32 %s18, 1
          %s236 = scalar_lea.sflag [#allocation7], %s235
          %s237 = sand.u32 %s68, 1
          %s238 = smul.addr %s237, 256
          %s239 = scalar_lea.vmem [#allocation6], %s238
          %s240 = smul.u32 64, %s26
          %s242 = ssub.s32 4096, 4096
          %243 = vsyncadd %s236, %s242
          %s244 = smul.addr %s240, 64
          %s245 = scalar_lea.hbm %s1, %s244
          %s246 = sshll.u32 %s239, 4
          %s247 = int_to_ptr.vmem [resolvable:$true] %s246
          %252 = dma.hbm_to_vmem [thread:$0]  %s245, 4096, %s247, %s236, 64, 64, 4
        $region36: #{tpu_custom_call.1} parent=27 // pred_fallthru
          _
      $region28: #{tpu_custom_call.1} parent=5 // pred_fallthru
        _
      %p253 = scmp.le.s32.totalorder 1, %s18
      %p254 = scmp.lt.s32.totalorder %s18, 3
      %p255 = pnand %p253, %p254
      %p256 = pneg %p255
      // Predicated region
      $region37: #{tpu_custom_call.1} parent=5 // pred_check
        _
      $region38: #{tpu_custom_call.1} parent=5 // pred_check_branch
        %258 = sbr.rel (%p255) target = $region40
      $region39: #{tpu_custom_call.1} parent=5 // pred_region
        %s259 = ssub.s32 %s18, 1
        %s260 = sand.u32 %s45, 1
        %s261 = scalar_lea.sflag [#allocation4], %s260
        %s262 = sand.u32 %s45, 1
        %s263 = smul.addr %s262, 8
        %s264 = scalar_lea.vmem [#allocation3], %s263
        // Predicated region
        $region41: #{tpu_custom_call.1} parent=39 // pred_check
          %p265 = pneg %p58
        $region42: #{tpu_custom_call.1} parent=39 // pred_check_branch
          %267 = sbr.rel (%p265) target = $region44
        $region43: #{tpu_custom_call.1} parent=39 // pred_region
          %268 = dma.done %s261, 128
        $region44: #{tpu_custom_call.1} parent=39 // pred_fallthru
          _
        %s269 = sand.u32 %s23, 1
        %s270 = scalar_lea.sflag [#allocation7], %s269
        %s271 = sand.u32 %s71, 1
        %s272 = smul.addr %s271, 256
        %s273 = scalar_lea.vmem [#allocation6], %s272
        // Predicated region
        $region45: #{tpu_custom_call.1} parent=39 // pred_check
          %p274 = pneg %p84
        $region46: #{tpu_custom_call.1} parent=39 // pred_check_branch
          %276 = sbr.rel (%p274) target = $region48
        $region47: #{tpu_custom_call.1} parent=39 // pred_region
          %277 = dma.done %s270, 4096
        $region48: #{tpu_custom_call.1} parent=39 // pred_fallthru
          _
        // Predicated region
        $region49: #{tpu_custom_call.1} parent=39 // pred_check
          %p278 = pneg %p126
        $region50: #{tpu_custom_call.1} parent=39 // pred_check_branch
          %280 = sbr.rel (%p278) target = $region52
        $region51: #{tpu_custom_call.1} parent=39 // pred_region
          %281 = dma.done [#allocation7], 1024
        $region52: #{tpu_custom_call.1} parent=39 // pred_fallthru
          _
        %s282 = sand.u32 %s45, 1
        %s283 = scalar_lea.sflag [#allocation4], %s282
        %s284 = sand.u32 %s45, 1
        %s285 = smul.addr %s284, 8
        %s286 = scalar_lea.vmem [#allocation3], %s285
        %p287 = pneg %p58
        %p288 = pneg %p55
        %s289 = sand.u32 %s23, 1
        %s290 = scalar_lea.sflag [#allocation7], %s289
        %s291 = sand.u32 %s71, 1
        %s292 = smul.addr %s291, 256
        %s293 = scalar_lea.vmem [#allocation6], %s292
        %p294 = pneg %p84
        %p295 = pneg %p81
        %p296 = pneg %p105
        %p297 = pneg %p102
        %p298 = pneg %p126
        %p299 = pneg %p123
        %p300 = pneg %p147
        %p301 = pneg %p144
        %p302 = pneg %p173
        %p303 = pneg %p170
        %s304 = smul.u32 4, %s28
        %s305 = smul.u32 64, %s28
        %p307 = scmp.eq.s32.totalorder %s28, 0
        // Predicated region
        $region53: #{tpu_custom_call.1} parent=39 // pred_check
          %p308 = pneg %p307
        $region54: #{tpu_custom_call.1} parent=39 // pred_check_branch
          %310 = sbr.rel (%p308) target = $region56
        $region55: #{tpu_custom_call.1} parent=39 // pred_region
          %311 = vst [vmem:[#allocation2] sm:$0xf] 0.0
        $region56: #{tpu_custom_call.1} parent=39 // pred_fallthru
          _
        %v312 = vld [vmem:[#allocation2] sm:$0xf]
        %v313 = vld [vmem:[%s264] sm:$0xff]
        %v314 = vld [vmem:[%s273] sm:$0xf]
        %v315 = vld [vmem:[%s273 + $0x4] sm:$0xf]
        %v316 = vld [vmem:[%s273 + $0x8] sm:$0xf]
        %v317 = vld [vmem:[%s273 + $0xc] sm:$0xf]
        %v318 = vld [vmem:[%s273 + $0x10] sm:$0xf]
        %v319 = vld [vmem:[%s273 + $0x14] sm:$0xf]
        %v320 = vld [vmem:[%s273 + $0x18] sm:$0xf]
        %v321 = vld [vmem:[%s273 + $0x1c] sm:$0xf]
        %v322 = vld [vmem:[%s273 + $0x20] sm:$0xf]
        %v323 = vld [vmem:[%s273 + $0x24] sm:$0xf]
        %v324 = vld [vmem:[%s273 + $0x28] sm:$0xf]
        %v325 = vld [vmem:[%s273 + $0x2c] sm:$0xf]
        %v326 = vld [vmem:[%s273 + $0x30] sm:$0xf]
        %v327 = vld [vmem:[%s273 + $0x34] sm:$0xf]
        %v328 = vld [vmem:[%s273 + $0x38] sm:$0xf]
        %v329 = vld [vmem:[%s273 + $0x3c] sm:$0xf]
        %v330 = vld [vmem:[%s273 + $0x40] sm:$0xf]
        %v331 = vld [vmem:[%s273 + $0x44] sm:$0xf]
        %v332 = vld [vmem:[%s273 + $0x48] sm:$0xf]
        %v333 = vld [vmem:[%s273 + $0x4c] sm:$0xf]
        %v334 = vld [vmem:[%s273 + $0x50] sm:$0xf]
        %v335 = vld [vmem:[%s273 + $0x54] sm:$0xf]
        %v336 = vld [vmem:[%s273 + $0x58] sm:$0xf]
        %v337 = vld [vmem:[%s273 + $0x5c] sm:$0xf]
        %v338 = vld [vmem:[%s273 + $0x60] sm:$0xf]
        %v339 = vld [vmem:[%s273 + $0x64] sm:$0xf]
        %v340 = vld [vmem:[%s273 + $0x68] sm:$0xf]
        %v341 = vld [vmem:[%s273 + $0x6c] sm:$0xf]
        %v342 = vld [vmem:[%s273 + $0x70] sm:$0xf]
        %v343 = vld [vmem:[%s273 + $0x74] sm:$0xf]
        %v344 = vld [vmem:[%s273 + $0x78] sm:$0xf]
        %v345 = vld [vmem:[%s273 + $0x7c] sm:$0xf]
        %v346 = vld [vmem:[%s273 + $0x80] sm:$0xf]
        %v347 = vld [vmem:[%s273 + $0x84] sm:$0xf]
        %v348 = vld [vmem:[%s273 + $0x88] sm:$0xf]
        %v349 = vld [vmem:[%s273 + $0x8c] sm:$0xf]
        %v350 = vld [vmem:[%s273 + $0x90] sm:$0xf]
        %v351 = vld [vmem:[%s273 + $0x94] sm:$0xf]
        %v352 = vld [vmem:[%s273 + $0x98] sm:$0xf]
        %v353 = vld [vmem:[%s273 + $0x9c] sm:$0xf]
        %v354 = vld [vmem:[%s273 + $0xa0] sm:$0xf]
        %v355 = vld [vmem:[%s273 + $0xa4] sm:$0xf]
        %v356 = vld [vmem:[%s273 + $0xa8] sm:$0xf]
        %v357 = vld [vmem:[%s273 + $0xac] sm:$0xf]
        %v358 = vld [vmem:[%s273 + $0xb0] sm:$0xf]
        %v359 = vld [vmem:[%s273 + $0xb4] sm:$0xf]
        %v360 = vld [vmem:[%s273 + $0xb8] sm:$0xf]
        %v361 = vld [vmem:[%s273 + $0xbc] sm:$0xf]
        %v362 = vld [vmem:[%s273 + $0xc0] sm:$0xf]
        %v363 = vld [vmem:[%s273 + $0xc4] sm:$0xf]
        %v364 = vld [vmem:[%s273 + $0xc8] sm:$0xf]
        %v365 = vld [vmem:[%s273 + $0xcc] sm:$0xf]
        %v366 = vld [vmem:[%s273 + $0xd0] sm:$0xf]
        %v367 = vld [vmem:[%s273 + $0xd4] sm:$0xf]
        %v368 = vld [vmem:[%s273 + $0xd8] sm:$0xf]
        %v369 = vld [vmem:[%s273 + $0xdc] sm:$0xf]
        %v370 = vld [vmem:[%s273 + $0xe0] sm:$0xf]
        %v371 = vld [vmem:[%s273 + $0xe4] sm:$0xf]
        %v372 = vld [vmem:[%s273 + $0xe8] sm:$0xf]
        %v373 = vld [vmem:[%s273 + $0xec] sm:$0xf]
        %v374 = vld [vmem:[%s273 + $0xf0] sm:$0xf]
        %v375 = vld [vmem:[%s273 + $0xf4] sm:$0xf]
        %v376 = vld [vmem:[%s273 + $0xf8] sm:$0xf]
        %v377 = vld [vmem:[%s273 + $0xfc] sm:$0xf]
        %v379 = vcombine.high %v313, %v313
        %v381 = vunpack.c.l.s4 1983009808
        %v382 = vunpack.c.0.s8 %v381
        %v383 = vlaneseq
        %v384 = vshrl.u32 %v383, 7
        %v385 = vsub.s32 %v382, %v384
        %v386 = vrot.slane %v313, %v385
        %v388 = vunpack.c.l.s4 1983009808
        %v389 = vunpack.c.0.s8 %v388
        %v390 = vlaneseq
        %v391 = vshrl.u32 %v390, 7
        %v392 = vsub.s32 %v389, %v391
        %v393 = vrot.slane %v379, %v392
        %v394 = vcombine.high %v386, %v386
        %v395 = vcombine.high %v393, %v393
        %v464 = vunpack.c.l.b16 %v314
        %v465 = vunpack.c.l.b16 %v315
        %v466 = vunpack.c.l.b16 %v316
        %v467 = vunpack.c.l.b16 %v317
        %v468 = vunpack.c.l.b16 %v318
        %v469 = vunpack.c.l.b16 %v319
        %v470 = vunpack.c.l.b16 %v320
        %v471 = vunpack.c.l.b16 %v321
        %v472 = vunpack.c.l.b16 %v322
        %v473 = vunpack.c.l.b16 %v323
        %v474 = vunpack.c.l.b16 %v324
        %v475 = vunpack.c.l.b16 %v325
        %v476 = vunpack.c.l.b16 %v326
        %v477 = vunpack.c.l.b16 %v327
        %v478 = vunpack.c.l.b16 %v328
        %v479 = vunpack.c.l.b16 %v329
        %v480 = vunpack.c.l.b16 %v330
        %v481 = vunpack.c.l.b16 %v331
        %v482 = vunpack.c.l.b16 %v332
        %v483 = vunpack.c.l.b16 %v333
        %v484 = vunpack.c.l.b16 %v334
        %v485 = vunpack.c.l.b16 %v335
        %v486 = vunpack.c.l.b16 %v336
        %v487 = vunpack.c.l.b16 %v337
        %v488 = vunpack.c.l.b16 %v338
        %v489 = vunpack.c.l.b16 %v339
        %v490 = vunpack.c.l.b16 %v340
        %v491 = vunpack.c.l.b16 %v341
        %v492 = vunpack.c.l.b16 %v342
        %v493 = vunpack.c.l.b16 %v343
        %v494 = vunpack.c.l.b16 %v344
        %v495 = vunpack.c.l.b16 %v345
        %v496 = vunpack.c.l.b16 %v346
        %v497 = vunpack.c.l.b16 %v347
        %v498 = vunpack.c.l.b16 %v348
        %v499 = vunpack.c.l.b16 %v349
        %v500 = vunpack.c.l.b16 %v350
        %v501 = vunpack.c.l.b16 %v351
        %v502 = vunpack.c.l.b16 %v352
        %v503 = vunpack.c.l.b16 %v353
        %v504 = vunpack.c.l.b16 %v354
        %v505 = vunpack.c.l.b16 %v355
        %v506 = vunpack.c.l.b16 %v356
        %v507 = vunpack.c.l.b16 %v357
        %v508 = vunpack.c.l.b16 %v358
        %v509 = vunpack.c.l.b16 %v359
        %v510 = vunpack.c.l.b16 %v360
        %v511 = vunpack.c.l.b16 %v361
        %v512 = vunpack.c.l.b16 %v362
        %v513 = vunpack.c.l.b16 %v363
        %v514 = vunpack.c.l.b16 %v364
        %v515 = vunpack.c.l.b16 %v365
        %v516 = vunpack.c.l.b16 %v366
        %v517 = vunpack.c.l.b16 %v367
        %v518 = vunpack.c.l.b16 %v368
        %v519 = vunpack.c.l.b16 %v369
        %v520 = vunpack.c.l.b16 %v370
        %v521 = vunpack.c.l.b16 %v371
        %v522 = vunpack.c.l.b16 %v372
        %v523 = vunpack.c.l.b16 %v373
        %v524 = vunpack.c.l.b16 %v374
        %v525 = vunpack.c.l.b16 %v375
        %v526 = vunpack.c.l.b16 %v376
        %v527 = vunpack.c.l.b16 %v377
        %v528 = vpack.c.b16 %v465, %v464
        %v529 = vpack.c.b16 %v467, %v466
        %v530 = vpack.c.b16 %v469, %v468
        %v531 = vpack.c.b16 %v471, %v470
        %v532 = vpack.c.b16 %v473, %v472
        %v533 = vpack.c.b16 %v475, %v474
        %v534 = vpack.c.b16 %v477, %v476
        %v535 = vpack.c.b16 %v479, %v478
        %v536 = vpack.c.b16 %v481, %v480
        %v537 = vpack.c.b16 %v483, %v482
        %v538 = vpack.c.b16 %v485, %v484
        %v539 = vpack.c.b16 %v487, %v486
        %v540 = vpack.c.b16 %v489, %v488
        %v541 = vpack.c.b16 %v491, %v490
        %v542 = vpack.c.b16 %v493, %v492
        %v543 = vpack.c.b16 %v495, %v494
        %v544 = vpack.c.b16 %v497, %v496
        %v545 = vpack.c.b16 %v499, %v498
        %v546 = vpack.c.b16 %v501, %v500
        %v547 = vpack.c.b16 %v503, %v502
        %v548 = vpack.c.b16 %v505, %v504
        %v549 = vpack.c.b16 %v507, %v506
        %v550 = vpack.c.b16 %v509, %v508
        %v551 = vpack.c.b16 %v511, %v510
        %v552 = vpack.c.b16 %v513, %v512
        %v553 = vpack.c.b16 %v515, %v514
        %v554 = vpack.c.b16 %v517, %v516
        %v555 = vpack.c.b16 %v519, %v518
        %v556 = vpack.c.b16 %v521, %v520
        %v557 = vpack.c.b16 %v523, %v522
        %v558 = vpack.c.b16 %v525, %v524
        %v559 = vpack.c.b16 %v527, %v526
        %592 = vmatprep.subr.bf16.mxu0 0
        %593 = vmatpush1.bf16.msra.mxu0 %v528
        %594 = vmatprep.subr.bf16.mxu0 0
        %595 = vmatpush1.bf16.msra.mxu0 %v529
        %596 = vmatprep.subr.bf16.mxu0 0
        %597 = vmatpush1.bf16.msra.mxu0 %v530
        %598 = vmatprep.subr.bf16.mxu0 0
        %599 = vmatpush1.bf16.msra.mxu0 %v531
        %600 = vmatprep.subr.bf16.mxu0 0
        %601 = vmatpush1.bf16.msra.mxu0 %v532
        %602 = vmatprep.subr.bf16.mxu0 0
        %603 = vmatpush1.bf16.msra.mxu0 %v533
        %604 = vmatprep.subr.bf16.mxu0 0
        %605 = vmatpush1.bf16.msra.mxu0 %v534
        %606 = vmatprep.subr.bf16.mxu0 0
        %607 = vmatpush1.bf16.msra.mxu0 %v535
        %608 = vmatprep.subr.bf16.mxu0 0
        %609 = vmatpush1.bf16.msra.mxu0 %v536
        %610 = vmatprep.subr.bf16.mxu0 0
        %611 = vmatpush1.bf16.msra.mxu0 %v537
        %612 = vmatprep.subr.bf16.mxu0 0
        %613 = vmatpush1.bf16.msra.mxu0 %v538
        %614 = vmatprep.subr.bf16.mxu0 0
        %615 = vmatpush1.bf16.msra.mxu0 %v539
        %616 = vmatprep.subr.bf16.mxu0 0
        %617 = vmatpush1.bf16.msra.mxu0 %v540
        %618 = vmatprep.subr.bf16.mxu0 0
        %619 = vmatpush1.bf16.msra.mxu0 %v541
        %620 = vmatprep.subr.bf16.mxu0 0
        %621 = vmatpush1.bf16.msra.mxu0 %v542
        %622 = vmatprep.subr.bf16.mxu0 0
        %623 = vmatpush1.bf16.msra.mxu0 %v543
        %624 = vmatprep.mubr.bf16.mxu0 %v394
        %625 = vmatmul.mubr.bf16.gmra.mrb[0].mxu0 %v386
        %v626 = vpop.f32.mrb[0].mxu0
        %v627 = vadd.f32 0.0, %v626
        %v628 = vpop.f32.mrb[0].mxu0
        %v629 = vpop.f32.mrb[0].mxu0
        %v630 = vpop.f32.mrb[0].mxu0
        %631 = vdwg.mxu0
        %632 = vmatprep.subr.bf16.mxu0 0
        %633 = vmatpush1.bf16.msra.mxu0 %v544
        %634 = vmatprep.subr.bf16.mxu0 0
        %635 = vmatpush1.bf16.msra.mxu0 %v545
        %636 = vmatprep.subr.bf16.mxu0 0
        %637 = vmatpush1.bf16.msra.mxu0 %v546
        %638 = vmatprep.subr.bf16.mxu0 0
        %639 = vmatpush1.bf16.msra.mxu0 %v547
        %640 = vmatprep.subr.bf16.mxu0 0
        %641 = vmatpush1.bf16.msra.mxu0 %v548
        %642 = vmatprep.subr.bf16.mxu0 0
        %643 = vmatpush1.bf16.msra.mxu0 %v549
        %644 = vmatprep.subr.bf16.mxu0 0
        %645 = vmatpush1.bf16.msra.mxu0 %v550
        %646 = vmatprep.subr.bf16.mxu0 0
        %647 = vmatpush1.bf16.msra.mxu0 %v551
        %648 = vmatprep.subr.bf16.mxu0 0
        %649 = vmatpush1.bf16.msra.mxu0 %v552
        %650 = vmatprep.subr.bf16.mxu0 0
        %651 = vmatpush1.bf16.msra.mxu0 %v553
        %652 = vmatprep.subr.bf16.mxu0 0
        %653 = vmatpush1.bf16.msra.mxu0 %v554
        %654 = vmatprep.subr.bf16.mxu0 0
        %655 = vmatpush1.bf16.msra.mxu0 %v555
        %656 = vmatprep.subr.bf16.mxu0 0
        %657 = vmatpush1.bf16.msra.mxu0 %v556
        %658 = vmatprep.subr.bf16.mxu0 0
        %659 = vmatpush1.bf16.msra.mxu0 %v557
        %660 = vmatprep.subr.bf16.mxu0 0
        %661 = vmatpush1.bf16.msra.mxu0 %v558
        %662 = vmatprep.subr.bf16.mxu0 0
        %663 = vmatpush1.bf16.msra.mxu0 %v559
        %664 = vmatprep.mubr.bf16.mxu0 %v395
        %665 = vmatmul.mubr.bf16.gmra.mrb[0].mxu0 %v393
        %v666 = vpop.f32.mrb[0].mxu0
        %v667 = vadd.f32 %v627, %v666
        %v668 = vpop.f32.mrb[0].mxu0
        %v669 = vpop.f32.mrb[0].mxu0
        %v670 = vpop.f32.mrb[0].mxu0
        %671 = vdwg.mxu0
        %v672 = vadd.f32 %v312, %v667
        %673 = vst [vmem:[#allocation2] sm:$0xf] %v672
        %p674 = scmp.eq.s32.totalorder %s28, 1
        // Predicated region
        $region57: #{tpu_custom_call.1} parent=39 // pred_check
          %p675 = pneg %p674
        $region58: #{tpu_custom_call.1} parent=39 // pred_check_branch
          %677 = sbr.rel (%p675) target = $region60
        $region59: #{tpu_custom_call.1} parent=39 // pred_region
          %v678 = vld [vmem:[#allocation2] sm:$0xf]
          %v679 = vld [vmem:[%s2] sm:$0x1]
          %v681 = vlaneseq
          %v682 = vshrl.u32 %v681, 7
          %v683 = vsub.s32 0, %v682
          %v684 = vrot.slane %v679, %v683
          %v686 = vadd.f32 %v678, %v684
          %v687 = vmax.f32 %v686, 0.0
          %v688 = vpack.c.bf16 %v687, %v687
          %v689 = vld [vmem:[#allocation8] sm:$0xf]
          %v690 = vld [vmem:[#allocation8 + $0x4] sm:$0xf]
          %v691 = vld [vmem:[#allocation8 + $0x8] sm:$0xf]
          %v692 = vld [vmem:[#allocation8 + $0xc] sm:$0xf]
          %v693 = vld [vmem:[#allocation8 + $0x10] sm:$0xf]
          %v694 = vld [vmem:[#allocation8 + $0x14] sm:$0xf]
          %v695 = vld [vmem:[#allocation8 + $0x18] sm:$0xf]
          %v696 = vld [vmem:[#allocation8 + $0x1c] sm:$0xf]
          %v697 = vld [vmem:[#allocation8 + $0x20] sm:$0xf]
          %v698 = vld [vmem:[#allocation8 + $0x24] sm:$0xf]
          %v699 = vld [vmem:[#allocation8 + $0x28] sm:$0xf]
          %v700 = vld [vmem:[#allocation8 + $0x2c] sm:$0xf]
          %v701 = vld [vmem:[#allocation8 + $0x30] sm:$0xf]
          %v702 = vld [vmem:[#allocation8 + $0x34] sm:$0xf]
          %v703 = vld [vmem:[#allocation8 + $0x38] sm:$0xf]
          %v704 = vld [vmem:[#allocation8 + $0x3c] sm:$0xf]
          %v705 = vld [vmem:[%s4] sm:$0x1]
          %v707 = vlaneseq
          %v708 = vshrl.u32 %v707, 7
          %v709 = vsub.s32 0, %v708
          %v710 = vrot.slane %v705, %v709
          %v728 = vunpack.c.l.b16 %v689
          %v729 = vunpack.c.l.b16 %v690
          %v730 = vunpack.c.l.b16 %v691
          %v731 = vunpack.c.l.b16 %v692
          %v732 = vunpack.c.l.b16 %v693
          %v733 = vunpack.c.l.b16 %v694
          %v734 = vunpack.c.l.b16 %v695
          %v735 = vunpack.c.l.b16 %v696
          %v736 = vunpack.c.l.b16 %v697
          %v737 = vunpack.c.l.b16 %v698
          %v738 = vunpack.c.l.b16 %v699
          %v739 = vunpack.c.l.b16 %v700
          %v740 = vunpack.c.l.b16 %v701
          %v741 = vunpack.c.l.b16 %v702
          %v742 = vunpack.c.l.b16 %v703
          %v743 = vunpack.c.l.b16 %v704
          %v744 = vpack.c.b16 %v729, %v728
          %v745 = vpack.c.b16 %v731, %v730
          %v746 = vpack.c.b16 %v733, %v732
          %v747 = vpack.c.b16 %v735, %v734
          %v748 = vpack.c.b16 %v737, %v736
          %v749 = vpack.c.b16 %v739, %v738
          %v750 = vpack.c.b16 %v741, %v740
          %v751 = vpack.c.b16 %v743, %v742
          %760 = vmatprep.subr.bf16.mxu0 0
          %761 = vmatpush1.bf16.msra.mxu0 %v744
          %762 = vmatprep.subr.bf16.mxu0 0
          %763 = vmatpush1.bf16.msra.mxu0 %v745
          %764 = vmatprep.subr.bf16.mxu0 0
          %765 = vmatpush1.bf16.msra.mxu0 %v746
          %766 = vmatprep.subr.bf16.mxu0 0
          %767 = vmatpush1.bf16.msra.mxu0 %v747
          %768 = vmatprep.subr.bf16.mxu0 0
          %769 = vmatpush1.bf16.msra.mxu0 %v748
          %770 = vmatprep.subr.bf16.mxu0 0
          %771 = vmatpush1.bf16.msra.mxu0 %v749
          %772 = vmatprep.subr.bf16.mxu0 0
          %773 = vmatpush1.bf16.msra.mxu0 %v750
          %774 = vmatprep.subr.bf16.mxu0 0
          %775 = vmatpush1.bf16.msra.mxu0 %v751
          %776 = vmatprep.subr.bf16.mxu0 0
          %777 = vmatpush1.bf16.msra.mxu0 0
          %778 = vmatprep.subr.bf16.mxu0 0
          %779 = vmatpush1.bf16.msra.mxu0 0
          %780 = vmatprep.subr.bf16.mxu0 0
          %781 = vmatpush1.bf16.msra.mxu0 0
          %782 = vmatprep.subr.bf16.mxu0 0
          %783 = vmatpush1.bf16.msra.mxu0 0
          %784 = vmatprep.subr.bf16.mxu0 0
          %785 = vmatpush1.bf16.msra.mxu0 0
          %786 = vmatprep.subr.bf16.mxu0 0
          %787 = vmatpush1.bf16.msra.mxu0 0
          %788 = vmatprep.subr.bf16.mxu0 0
          %789 = vmatpush1.bf16.msra.mxu0 0
          %790 = vmatprep.subr.bf16.mxu0 0
          %791 = vmatpush1.bf16.msra.mxu0 0
          %792 = vmatprep.mubr.bf16.mxu0 0
          %793 = vmatmul.mubr.bf16.gmra.mrb[0].mxu0 %v688
          %v794 = vpop.f32.mrb[0].mxu0
          %v795 = vadd.f32 %v710, %v794
          %v796 = vpop.f32.mrb[0].mxu0
          %v797 = vpop.f32.mrb[0].mxu0
          %v798 = vpop.f32.mrb[0].mxu0
          %799 = vdwg.mxu0
          %800 = vst [vmem:[#allocation9] sm:$0xf] %v795
        $region60: #{tpu_custom_call.1} parent=39 // pred_fallthru
          _
        // Predicated region
        $region61: #{tpu_custom_call.1} parent=39 // pred_check
          %p801 = pneg %p170
        $region62: #{tpu_custom_call.1} parent=39 // pred_check_branch
          %803 = sbr.rel (%p801) target = $region64
        $region63: #{tpu_custom_call.1} parent=39 // pred_region
          %s805 = ssub.s32 64, 64
          %806 = vsyncadd [#allocation5], %s805
          %s807 = smul.addr %s27, 64
          %s808 = scalar_lea.hbm %s5, %s807
          %s810 = sshll.u32 [#allocation9], 4
          %s811 = int_to_ptr.vmem [resolvable:$true] %s810
          %813 = dma.vmem_to_hbm [thread:$0]  %s811, 64, %s808, [#allocation5]
        $region64: #{tpu_custom_call.1} parent=39 // pred_fallthru
          _
        // Predicated region
        $region65: #{tpu_custom_call.1} parent=39 // pred_check
          %p814 = pneg %p170
        $region66: #{tpu_custom_call.1} parent=39 // pred_check_branch
          %816 = sbr.rel (%p814) target = $region68
        $region67: #{tpu_custom_call.1} parent=39 // pred_region
          %817 = dma.done [#allocation5], 64
        $region68: #{tpu_custom_call.1} parent=39 // pred_fallthru
          _
      $region40: #{tpu_custom_call.1} parent=5 // pred_fallthru
        _
      %p818 = scmp.le.s32.totalorder 2, %s18
      // Predicated region
      $region69: #{tpu_custom_call.1} parent=5 // pred_check
        %p819 = pneg %p818
      $region70: #{tpu_custom_call.1} parent=5 // pred_check_branch
        %821 = sbr.rel (%p819) target = $region72
      $region71: #{tpu_custom_call.1} parent=5 // pred_region
        %s822 = ssub.s32 %s18, 2
      $region72: #{tpu_custom_call.1} parent=5 // pred_fallthru
        _
    $region6: #{tpu_custom_call.1} parent=1 // loop_footer
      %s22 = sadd.s32 1, %s18
    $region7: #{tpu_custom_call.1} parent=1 // loop_footer_branch
      %17 = sbr.rel target = $region3
    $region8: #{tpu_custom_call.1} parent=1 // loop_exit
      _
    %823 = vsyncpa [#allocation4], 1
    %s824 = scalar_lea.sflag [#allocation4], 1
    %825 = vsyncpa %s824, 1
    %826 = vsyncpa [#allocation7], 1
    %s827 = scalar_lea.sflag [#allocation7], 1
    %828 = vsyncpa %s827, 1
    %829 = vsyncpa [#allocation5], 1
    %s830 = scalar_lea.sflag [#allocation5], 1
    %831 = vsyncpa %s830, 1

</llo_original>
